<compile_context>
chip_gen: v5e
topology: v5e:2x2
jax: 0.10.0
libtpu: 0.0.40
codegen_flags: <defaults>
</compile_context>

<pallas_src>
import functools

import jax
import jax.numpy as jnp
from jax import lax
from jax.experimental import pallas as pl
from jax.experimental.pallas import tpu as pltpu


def _round_up(x, m):
    return ((x + m - 1) // m) * m


def _dsdh_metric_kernel(ub_ref, u_ref, s_ref, out_ref, acc_ref, *, sp_dtype):
    i = pl.program_id(1)  # reduction step within this parallel slice

    @pl.when(i == 0)
    def _():
        acc_ref[...] = jnp.zeros_like(acc_ref)

    # theta_tile = U_tile^T @ (U_batch * 0.5) -> (tile_n, Bp), f32 MXU accumulate.
    theta = lax.dot_general(
        u_ref[...], ub_ref[...],
        dimension_numbers=(((0,), (0,)), ((), ())),
        preferred_element_type=jnp.float32,
    )
    theta = jnp.clip(theta, -100.0, 50.0)

    # Elementwise softplus / S*theta in sp_dtype (bf16 on the bf16 path),
    # accumulated elementwise into the f32 VMEM scratch (no per-step reduce).
    t = theta.astype(sp_dtype)
    s = s_ref[...].astype(sp_dtype)
    acc_ref[...] += (jnp.log1p(jnp.exp(t)) - s * t).astype(jnp.float32)

    @pl.when(i == pl.num_programs(1) - 1)
    def _():
        # One sublane (XLU) reduce per slice, off the per-step critical path.
        out_ref[...] = jnp.sum(acc_ref[...], axis=0, keepdims=True)


def _vmem_need(tile_n, batch_p, n_bits, u_isize, s_isize):
    return (2 * tile_n * batch_p * s_isize        # double-buffered S tiles
            + 2 * n_bits * tile_n * u_isize       # double-buffered U tiles
            + tile_n * batch_p * 4                # f32 scratch accumulator
            + 2 * n_bits * batch_p * u_isize      # U_batch buffers
            + 2 * batch_p * 4                     # output block buffers
            + (1 << 20))                          # Mosaic internal scratch slack


def _choose_tile_n(n_train, batch_p, n_bits, u_isize, s_isize,
                   vmem_budget=16 << 20):
    """Largest candidate tile that fits the budget (no divisibility needed)."""
    tile = 128
    for cand in (2048, 1024, 512, 256, 128):
        if _vmem_need(cand, batch_p, n_bits, u_isize, s_isize) <= vmem_budget:
            tile = cand
            break
    # Don't pad n_train beyond one lane-aligned tile's worth.
    tile = min(tile, _round_up(max(n_train, 1), 128))
    return tile


def _default_num_splits():
    """2 only on 2-TensorCore chips (v7x); 1 on single-TC v5e/v6e."""
    try:
        kind = jax.devices()[0].device_kind.lower()
    except Exception:  # pragma: no cover - be conservative
        return 1
    return 2 if ("v7" in kind or "tpu7" in kind) else 1


def dsdh_loss(U_batch, U, S, B, noises, *, eta, beta,
              tile_n=None, num_splits=None, softplus_dtype=None):
    """Pallas implementation of DSDHLoss.forward.  Returns a scalar float32.

    U / U_batch may be bf16 (halves the U HBM traffic) and S may be int8/uint8
    (the dominant HBM stream); all accumulation is in float32.
    """
    n_bits, batch = U_batch.shape
    n_bits2, n_train = U.shape
    assert n_bits == n_bits2
    assert S.shape == (n_train, batch)
    assert B.shape == (n_bits, batch)

    kdtype = jnp.dtype(U.dtype)          # MXU operand dtype
    s_isize = jnp.dtype(S.dtype).itemsize

    # Elementwise compute dtype: bf16 (faster EUP on v6e/v7x) only when the
    # inputs are already bf16, so the f32 path keeps full precision.
    if softplus_dtype is None:
        sp_dtype = jnp.bfloat16 if kdtype == jnp.bfloat16 else jnp.float32
    else:
        sp_dtype = jnp.dtype(softplus_dtype)

    # Small wrapper-side terms use the ORIGINAL U_batch precision.
    ub32 = U_batch.astype(jnp.float32)

    # Kernel copy of U_batch: fold the theta * 0.5 (exact) and match U's dtype.
    ub_k = (U_batch * 0.5).astype(kdtype)

    # Lane-pad batch to a multiple of 128 (lane-dense stores / loads).
    Bp = _round_up(batch, 128)

    if tile_n is None:
        tile_n = _choose_tile_n(n_train, Bp, n_bits, kdtype.itemsize, s_isize)
    assert tile_n % 128 == 0, tile_n
    Np = _round_up(n_train, tile_n)
    need = _vmem_need(tile_n, Bp, n_bits, kdtype.itemsize, s_isize)

    # Zero-pad; padded entries contribute exactly softplus(0) each to the
    # metric sum and are subtracted analytically below.
    if Bp != batch:
        ub_k = jnp.pad(ub_k, ((0, 0), (0, Bp - batch)))
    U_k = U if Np == n_train else jnp.pad(U, ((0, 0), (0, Np - n_train)))
    S_k = S
    if (Np, Bp) != (n_train, batch):
        S_k = jnp.pad(S, ((0, Np - n_train), (0, Bp - batch)))

    num_tiles = Np // tile_n
    if num_splits is None:
        num_splits = _default_num_splits()
    P = num_splits if (num_splits > 1 and num_tiles % num_splits == 0) else 1
    steps = num_tiles // P

    vmem_limit = int(min(48 << 20, max(32 << 20, 2 * need + (4 << 20))))

    cost = pl.CostEstimate(
        flops=2 * n_bits * Np * Bp + 5 * Np * Bp,
        transcendentals=2 * Np * Bp,
        bytes_accessed=int(U_k.size * U_k.dtype.itemsize
                           + S_k.size * S_k.dtype.itemsize
                           + ub_k.size * ub_k.dtype.itemsize
                           + P * Bp * 4),
    )

    partial = pl.pallas_call(
        functools.partial(_dsdh_metric_kernel, sp_dtype=sp_dtype),
        out_shape=jax.ShapeDtypeStruct((P, 1, Bp), jnp.float32),
        grid_spec=pltpu.PrefetchScalarGridSpec(
            num_scalar_prefetch=0,
            grid=(P, steps),
            in_specs=[
                pl.BlockSpec((n_bits, Bp), lambda p, i: (0, 0)),                  # U_batch/2
                pl.BlockSpec((n_bits, tile_n), lambda p, i: (0, p * steps + i)),  # U tile
                pl.BlockSpec((tile_n, Bp), lambda p, i: (p * steps + i, 0)),      # S tile
            ],
            out_specs=pl.BlockSpec((pl.Squeezed(), 1, Bp), lambda p, i: (p, 0, 0)),
            scratch_shapes=[pltpu.VMEM((tile_n, Bp), jnp.float32)],
        ),
        compiler_params=pltpu.CompilerParams(
            dimension_semantics=("parallel", "arbitrary"),
            vmem_limit_bytes=vmem_limit),
        cost_estimate=cost,
    )(ub_k, U_k, S_k)

    # Analytic correction for zero-padded entries: each contributes exactly
    # softplus(0) (evaluated in sp_dtype, matching the kernel) to the sum.
    sp0 = jnp.log1p(jnp.exp(jnp.zeros((), sp_dtype))).astype(jnp.float32)
    pad_count = Np * Bp - n_train * batch
    metric_sum = jnp.sum(partial) - sp0 * jnp.float32(pad_count)
    metric_loss = metric_sum / jnp.float32(n_train * batch)

    # Quantization / noise terms: tiny (n_bits, batch) tensors, plain JAX,
    # using the ORIGINAL (un-downcast) U_batch.
    quantization_loss = jnp.mean((B.astype(jnp.float32) - ub32) ** 2)
    loss = metric_loss + jnp.float32(eta) * quantization_loss
    if noises is not None:
        loss = loss + jnp.float32(beta) * jnp.mean(ub32 * noises.astype(jnp.float32))
    return loss


def dsdh_loss_ref(U_batch, U, S, B, noises, *, eta, beta):
    """Pure-JAX reference mirroring the PyTorch module (f32)."""
    U_batch = U_batch.astype(jnp.float32)
    U = U.astype(jnp.float32)
    S = S.astype(jnp.float32)
    theta = jnp.clip(U.T @ U_batch / 2.0, -100.0, 50.0)
    metric = jnp.mean(jnp.log(1.0 + jnp.exp(theta)) - S * theta)
    quant = jnp.mean((B.astype(jnp.float32) - U_batch) ** 2)
    loss = metric + eta * quant
    if noises is not None:
        loss = loss + beta * jnp.mean(U_batch * noises.astype(jnp.float32))
    return loss


if __name__ == "__main__":
    eta, beta = 0.1, 0.5
    key = jax.random.PRNGKey(0)

    # --- Aligned shapes -----------------------------------------------------
    n_bits, n_train, batch = 32, 256, 128
    k1, k2, k3, k4, k5 = jax.random.split(key, 5)
    U_batch = jax.random.normal(k1, (n_bits, batch), jnp.float32)
    U = jax.random.normal(k2, (n_bits, n_train), jnp.float32)
    S = (jax.random.uniform(k3, (n_train, batch)) > 0.5).astype(jnp.int8)  # int8 S
    Bcode = jnp.sign(jax.random.normal(k4, (n_bits, batch), jnp.float32))
    noises = 0.1 * jax.random.normal(k5, (n_bits, batch), jnp.float32)

    loss = jax.block_until_ready(
        dsdh_loss(U_batch, U, S, Bcode, noises, eta=eta, beta=beta))
    ref = dsdh_loss_ref(U_batch, U, S, Bcode, noises, eta=eta, beta=beta)
    assert jnp.allclose(loss, ref, rtol=1e-5, atol=1e-5), (loss, ref)

    # noises=None path
    loss_nn = jax.block_until_ready(
        dsdh_loss(U_batch, U, S, Bcode, None, eta=eta, beta=beta))
    ref_nn = dsdh_loss_ref(U_batch, U, S, Bcode, None, eta=eta, beta=beta)
    assert jnp.allclose(loss_nn, ref_nn, rtol=1e-5, atol=1e-5), (loss_nn, ref_nn)

    # bf16 input path (bf16 softplus on v6e/v7x) -- looser tolerance.
    loss_bf16 = jax.block_until_ready(
        dsdh_loss(U_batch.astype(jnp.bfloat16), U.astype(jnp.bfloat16),
                  S, Bcode, noises, eta=eta, beta=beta))
    assert jnp.allclose(loss_bf16, ref, rtol=5e-2, atol=5e-2), (loss_bf16, ref)

    # --- Awkward (non-aligned) shapes: exercises padding + analytic fix -----
    n_bits2, n_train2, batch2 = 32, 300, 96
    j1, j2, j3, j4, j5 = jax.random.split(jax.random.PRNGKey(1), 5)
    U_batch2 = jax.random.normal(j1, (n_bits2, batch2), jnp.float32)
    U2 = jax.random.normal(j2, (n_bits2, n_train2), jnp.float32)
    S2 = (jax.random.uniform(j3, (n_train2, batch2)) > 0.5).astype(jnp.int8)
    B2 = jnp.sign(jax.random.normal(j4, (n_bits2, batch2), jnp.float32))
    noises2 = 0.1 * jax.random.normal(j5, (n_bits2, batch2), jnp.float32)

    loss2 = jax.block_until_ready(
        dsdh_loss(U_batch2, U2, S2, B2, noises2, eta=eta, beta=beta))
    ref2 = dsdh_loss_ref(U_batch2, U2, S2, B2, noises2, eta=eta, beta=beta)
    assert jnp.allclose(loss2, ref2, rtol=1e-4, atol=1e-5), (loss2, ref2)

    print("KERNEL_OK")
</pallas_src>

<mosaic_0001>
module attributes {stable_mosaic.version = 11 : i64} {
  func.func @_dsdh_metric_kernel(%arg0: i32, %arg1: i32, %arg2: memref<32x128xf32, #tpu.memory_space<vmem>>, %arg3: memref<32x256xf32, #tpu.memory_space<vmem>>, %arg4: memref<256x128xi8, #tpu.memory_space<vmem>>, %arg5: memref<1x1x128xf32, #tpu.memory_space<vmem>>, %arg6: memref<256x128xf32, #tpu.memory_space<vmem>>) attributes {dimension_semantics = [#tpu.dimension_semantics<parallel>, #tpu.dimension_semantics<arbitrary>], iteration_bounds = array<i64: 1, 1>, scalar_prefetch = 0 : i64, scratch_operands = 1 : i64, tpu.core_type = #tpu.core_type<tc>, window_params = [{pipeline_mode = #tpu.pipeline_mode<synchronous>, transform_indices = @transform_0, window_bounds = array<i64: 32, 128>}, {transform_indices = @transform_1, window_bounds = array<i64: 32, 256>}, {transform_indices = @transform_2, window_bounds = array<i64: 256, 128>}, {transform_indices = @transform_3, window_bounds = array<i64: 1, 1, 128>}]} {
    %c0_i32 = arith.constant 0 : i32
    %0 = arith.cmpi eq, %arg1, %c0_i32 : i32
    %1 = arith.extui %0 : i1 to i32
    %c0_i32_0 = arith.constant 0 : i32
    %2 = arith.cmpi ne, %1, %c0_i32_0 : i32
    scf.if %2 {
      %cst_14 = arith.constant 0.000000e+00 : f32
      %22 = vector.broadcast %cst_14 : f32 to vector<256x128xf32>
      %c0_15 = arith.constant 0 : index
      %c0_16 = arith.constant 0 : index
      %23 = vector.load %arg6[%c0_15, %c0_16] : memref<256x128xf32, #tpu.memory_space<vmem>>, vector<256x128xf32>
      tpu.vector_store %arg6[%c0_15, %c0_16], %22 {strides = array<i32>} : memref<256x128xf32, #tpu.memory_space<vmem>>, vector<256x128xf32>,
    } else {
    }
    %c0 = arith.constant 0 : index
    %c0_1 = arith.constant 0 : index
    %3 = vector.load %arg3[%c0, %c0_1] : memref<32x256xf32, #tpu.memory_space<vmem>>, vector<32x256xf32>
    %c0_2 = arith.constant 0 : index
    %c0_3 = arith.constant 0 : index
    %4 = vector.load %arg2[%c0_2, %c0_3] : memref<32x128xf32, #tpu.memory_space<vmem>>, vector<32x128xf32>
    %cst = arith.constant dense<0.000000e+00> : vector<256x128xf32>
    %5 = tpu.matmul %3, %4, %cst {dimension_numbers = #tpu.dot_dimension_numbers<[0], [0], [1], [1], [0, 1, 1, 1], [], []>} : vector<32x256xf32>, vector<32x128xf32>, vector<256x128xf32> -> vector<256x128xf32>
    %cst_4 = arith.constant -1.000000e+02 : f32
    %cst_5 = arith.constant 5.000000e+01 : f32
    %6 = vector.broadcast %cst_4 : f32 to vector<256x128xf32>
    %7 = arith.maximumf %6, %5 : vector<256x128xf32>
    %8 = vector.broadcast %cst_5 : f32 to vector<256x128xf32>
    %9 = arith.minimumf %8, %7 : vector<256x128xf32>
    %c0_6 = arith.constant 0 : index
    %c0_7 = arith.constant 0 : index
    %10 = vector.load %arg4[%c0_6, %c0_7] : memref<256x128xi8, #tpu.memory_space<vmem>>, vector<256x128xi8>
    %11 = arith.sitofp %10 : vector<256x128xi8> to vector<256x128xf32>
    %c0_8 = arith.constant 0 : index
    %c0_9 = arith.constant 0 : index
    %12 = vector.load %arg6[%c0_8, %c0_9] : memref<256x128xf32, #tpu.memory_space<vmem>>, vector<256x128xf32>
    %13 = math.exp %9 : vector<256x128xf32>
    %14 = math.log1p %13 : vector<256x128xf32>
    %15 = arith.mulf %11, %9 : vector<256x128xf32>
    %16 = arith.subf %14, %15 : vector<256x128xf32>
    %17 = arith.addf %12, %16 : vector<256x128xf32>
    %c0_10 = arith.constant 0 : index
    %c0_11 = arith.constant 0 : index
    %18 = vector.load %arg6[%c0_10, %c0_11] : memref<256x128xf32, #tpu.memory_space<vmem>>, vector<256x128xf32>
    tpu.vector_store %arg6[%c0_10, %c0_11], %17 {strides = array<i32>} : memref<256x128xf32, #tpu.memory_space<vmem>>, vector<256x128xf32>,
    %c0_i32_12 = arith.constant 0 : i32
    %19 = arith.cmpi eq, %arg1, %c0_i32_12 : i32
    %20 = arith.extui %19 : i1 to i32
    %c0_i32_13 = arith.constant 0 : i32
    %21 = arith.cmpi ne, %20, %c0_i32_13 : i32
    scf.if %21 {
      %c0_14 = arith.constant 0 : index
      %c0_15 = arith.constant 0 : index
      %22 = vector.load %arg6[%c0_14, %c0_15] : memref<256x128xf32, #tpu.memory_space<vmem>>, vector<256x128xf32>
      %cst_16 = arith.constant dense<0.000000e+00> : vector<128xf32>
      %23 = vector.multi_reduction <add>, %22, %cst_16 [0] : vector<256x128xf32> to vector<128xf32>
      %24 = vector.shape_cast %23 : vector<128xf32> to vector<1x128xf32>
      %c0_17 = arith.constant 0 : index
      %c0_18 = arith.constant 0 : index
      %c0_19 = arith.constant 0 : index
      %25 = vector.load %arg5[%c0_17, %c0_18, %c0_19] : memref<1x1x128xf32, #tpu.memory_space<vmem>>, vector<1x1x128xf32>
      %26 = vector.shape_cast %25 : vector<1x1x128xf32> to vector<1x128xf32>
      %27 = vector.shape_cast %24 : vector<1x128xf32> to vector<1x1x128xf32>
      tpu.vector_store %arg5[%c0_17, %c0_18, %c0_19], %27 {strides = array<i32>} : memref<1x1x128xf32, #tpu.memory_space<vmem>>, vector<1x1x128xf32>,
    } else {
    }
    return
  }
  func.func @transform_0(%arg0: i32, %arg1: i32) -> (i32, i32) {
    %c0_i32 = arith.constant 0 : i32
    %c0_i32_0 = arith.constant 0 : i32
    %c0_i32_1 = arith.constant 0 : i32
    return %c0_i32, %c0_i32_0 : i32, i32
  }
  func.func @transform_1(%arg0: i32, %arg1: i32) -> (i32, i32) {
    %c1_i32 = arith.constant 1 : i32
    %0 = arith.muli %arg0, %c1_i32 : i32
    %1 = arith.addi %0, %arg1 : i32
    %c0_i32 = arith.constant 0 : i32
    %c0_i32_0 = arith.constant 0 : i32
    return %c0_i32, %1 : i32, i32
  }
  func.func @transform_2(%arg0: i32, %arg1: i32) -> (i32, i32) {
    %c1_i32 = arith.constant 1 : i32
    %0 = arith.muli %arg0, %c1_i32 : i32
    %1 = arith.addi %0, %arg1 : i32
    %c0_i32 = arith.constant 0 : i32
    %c0_i32_0 = arith.constant 0 : i32
    return %1, %c0_i32 : i32, i32
  }
  func.func @transform_3(%arg0: i32, %arg1: i32) -> (i32, i32, i32) {
    %c0_i32 = arith.constant 0 : i32
    %c0_i32_0 = arith.constant 0 : i32
    %c0_i32_1 = arith.constant 0 : i32
    return %arg0, %c0_i32, %c0_i32_0 : i32, i32, i32
  }
}

</mosaic_0001>

<llo_original>
// kernel: tpu_custom_call.1
$region0: #{tpu_custom_call.1}
  #allocation0 [shape = 'u32[]', space=smem, size = 0x4, offset = 0x4, fixed_abs, tag = 'smem constant byte address 0x4 - core index']
  #allocation1 [shape = 'u32[72,128]{1,0:T(1,128)}', space=vmem, size = 0x9000, scoped, tag = 'internal scratch']
  #allocation2 [shape = 'f32[256,128]{1,0:T(8,128)}', space=vmem, size = 0x20000, scoped, tag = 'scratch operand']
  %s0 = inlined_call_operand.hbm [shape: f32[32,128], index: 0, kind: input, shape index: {}]
  %s1 = inlined_call_operand.hbm [shape: f32[32,256], index: 1, kind: input, shape index: {}]
  %s2 = inlined_call_operand.hbm [shape: s8[256,128], index: 2, kind: input, shape index: {}]
  %s3 = inlined_call_operand.hbm [shape: f32[1,1,128], index: 3, kind: output, shape index: {}]
  %s4 = sld [smem:[#allocation0]]
  $region42: #{tpu_custom_call.1} parent=0
    _
  %s6 = ssub.s32 1, %s4
  %s7 = scalar_select 0, %s6, %s4
  $region1: #{tpu_custom_call.1} parent=0
    #allocation3 [shape = 'u8[16384]{0}', space=vmem, size = 0x4000, scoped, tag = 'input window, operand 0, single buffered']
    #allocation4 [shape = 's32[1]{0}', space=sflag, size = 0x4, scoped, tag = 'scoped memory for tpu_custom_call.1']
    #allocation5 [shape = 's32[1]{0}', space=sflag, size = 0x4, scoped, tag = 'scoped memory for tpu_custom_call.1']
    #allocation6 [shape = 'u8[32768]{0}', space=vmem, size = 0x8000, scoped, tag = 'input window, operand 1, single buffered']
    #allocation7 [shape = 's32[1]{0}', space=sflag, size = 0x4, scoped, tag = 'scoped memory for tpu_custom_call.1']
    #allocation8 [shape = 'u8[32768]{0}', space=vmem, size = 0x8000, scoped, tag = 'input window, operand 2, single buffered']
    #allocation9 [shape = 'u8[512]{0}', space=vmem, size = 0x400, scoped, tag = 'output window, operand 0, single buffered']
    %8 = vsyncpa [#allocation4], 0
    %9 = vsyncpa [#allocation7], 0
    %10 = vsyncpa [#allocation5], 0
    // Predicated region
    $region2: #{tpu_custom_call.1} parent=1 // pred_check
      _
    $region3: #{tpu_custom_call.1} parent=1 // pred_check_branch
      %12 = sbr.rel (0) target = $region5
    $region4: #{tpu_custom_call.1} parent=1 // pred_region
      %14 = vsyncadd [#allocation4], 0
      %s15 = sshll.u32 %s0, 4
      %s16 = int_to_ptr.hbm [resolvable:$true] %s15
      %s17 = sshll.u32 [#allocation3], 4
      %s18 = int_to_ptr.vmem [resolvable:$true] %s17
      %23 = dma.hbm_to_vmem [thread:$0]  %s16, 512, %s18, [#allocation4], 128, 128, 8
    $region5: #{tpu_custom_call.1} parent=1 // pred_fallthru
      _
    // Predicated region
    $region6: #{tpu_custom_call.1} parent=1 // pred_check
      _
    $region7: #{tpu_custom_call.1} parent=1 // pred_check_branch
      %25 = sbr.rel (0) target = $region9
    $region8: #{tpu_custom_call.1} parent=1 // pred_region
      %s26 = sadd.s32 0, 0
      %s27 = smul.u32 2, %s26
      %29 = vsyncadd [#allocation7], 0
      %s30 = smul.addr %s27, 8
      %s31 = scalar_lea.hbm %s1, %s30
      %s32 = sshll.u32 %s31, 4
      %s33 = int_to_ptr.hbm [resolvable:$true] %s32
      %s34 = sshll.u32 [#allocation6], 4
      %s35 = int_to_ptr.vmem [resolvable:$true] %s34
      %40 = dma.hbm_to_vmem [thread:$0]  %s33, 1024, %s35, [#allocation7], 256, 256, 16
    $region9: #{tpu_custom_call.1} parent=1 // pred_fallthru
      _
    // Predicated region
    $region10: #{tpu_custom_call.1} parent=1 // pred_check
      _
    $region11: #{tpu_custom_call.1} parent=1 // pred_check_branch
      %42 = sbr.rel (0) target = $region13
    $region12: #{tpu_custom_call.1} parent=1 // pred_region
      %s43 = sadd.s32 0, 0
      %s44 = smul.u32 8, %s43
      %46 = vsyncadd [#allocation7], 0
      %s47 = smul.addr %s44, 8
      %s48 = scalar_lea.hbm %s2, %s47
      %s49 = sshll.u32 %s48, 4
      %s50 = int_to_ptr.hbm [resolvable:$true] %s49
      %s51 = sshll.u32 [#allocation8], 4
      %s52 = int_to_ptr.vmem [resolvable:$true] %s51
      %57 = dma.hbm_to_vmem [thread:$0]  %s50, 1024, %s52, [#allocation7], 128, 128, 8
    $region13: #{tpu_custom_call.1} parent=1 // pred_fallthru
      _
    // Predicated region
    $region14: #{tpu_custom_call.1} parent=1 // pred_check
      _
    $region15: #{tpu_custom_call.1} parent=1 // pred_check_branch
      %59 = sbr.rel (0) target = $region17
    $region16: #{tpu_custom_call.1} parent=1 // pred_region
      %61 = dma.done [#allocation4], 512
    $region17: #{tpu_custom_call.1} parent=1 // pred_fallthru
      _
    // Predicated region
    $region18: #{tpu_custom_call.1} parent=1 // pred_check
      _
    $region19: #{tpu_custom_call.1} parent=1 // pred_check_branch
      %63 = sbr.rel (0) target = $region21
    $region20: #{tpu_custom_call.1} parent=1 // pred_region
      %65 = dma.done [#allocation7], 1024
    $region21: #{tpu_custom_call.1} parent=1 // pred_fallthru
      _
    // Predicated region
    $region22: #{tpu_custom_call.1} parent=1 // pred_check
      _
    $region23: #{tpu_custom_call.1} parent=1 // pred_check_branch
      %67 = sbr.rel (0) target = $region25
    $region24: #{tpu_custom_call.1} parent=1 // pred_region
      %69 = dma.done [#allocation7], 1024
    $region25: #{tpu_custom_call.1} parent=1 // pred_fallthru
      _
    %s70 = sadd.s32 0, 0
    %s71 = smul.u32 2, %s70
    %s72 = sadd.s32 0, 0
    %s73 = smul.u32 8, %s72
    %p74 = scmp.eq.s32.totalorder 0, 0
    // Predicated region
    $region26: #{tpu_custom_call.1} parent=1 // pred_check
      %p75 = pneg %p74
    $region27: #{tpu_custom_call.1} parent=1 // pred_check_branch
      %77 = sbr.rel (%p75) target = $region29
    $region28: #{tpu_custom_call.1} parent=1 // pred_region
      %78 = vst [vmem:[#allocation2] sm:$0xff] 0.0
      %79 = vst [vmem:[#allocation2 + $0x8] sm:$0xff] 0.0
      %80 = vst [vmem:[#allocation2 + $0x10] sm:$0xff] 0.0
      %81 = vst [vmem:[#allocation2 + $0x18] sm:$0xff] 0.0
      %82 = vst [vmem:[#allocation2 + $0x20] sm:$0xff] 0.0
      %83 = vst [vmem:[#allocation2 + $0x28] sm:$0xff] 0.0
      %84 = vst [vmem:[#allocation2 + $0x30] sm:$0xff] 0.0
      %85 = vst [vmem:[#allocation2 + $0x38] sm:$0xff] 0.0
      %86 = vst [vmem:[#allocation2 + $0x40] sm:$0xff] 0.0
      %87 = vst [vmem:[#allocation2 + $0x48] sm:$0xff] 0.0
      %88 = vst [vmem:[#allocation2 + $0x50] sm:$0xff] 0.0
      %89 = vst [vmem:[#allocation2 + $0x58] sm:$0xff] 0.0
      %90 = vst [vmem:[#allocation2 + $0x60] sm:$0xff] 0.0
      %91 = vst [vmem:[#allocation2 + $0x68] sm:$0xff] 0.0
      %92 = vst [vmem:[#allocation2 + $0x70] sm:$0xff] 0.0
      %93 = vst [vmem:[#allocation2 + $0x78] sm:$0xff] 0.0
      %94 = vst [vmem:[#allocation2 + $0x80] sm:$0xff] 0.0
      %95 = vst [vmem:[#allocation2 + $0x88] sm:$0xff] 0.0
      %96 = vst [vmem:[#allocation2 + $0x90] sm:$0xff] 0.0
      %97 = vst [vmem:[#allocation2 + $0x98] sm:$0xff] 0.0
      %98 = vst [vmem:[#allocation2 + $0xa0] sm:$0xff] 0.0
      %99 = vst [vmem:[#allocation2 + $0xa8] sm:$0xff] 0.0
      %100 = vst [vmem:[#allocation2 + $0xb0] sm:$0xff] 0.0
      %101 = vst [vmem:[#allocation2 + $0xb8] sm:$0xff] 0.0
      %102 = vst [vmem:[#allocation2 + $0xc0] sm:$0xff] 0.0
      %103 = vst [vmem:[#allocation2 + $0xc8] sm:$0xff] 0.0
      %104 = vst [vmem:[#allocation2 + $0xd0] sm:$0xff] 0.0
      %105 = vst [vmem:[#allocation2 + $0xd8] sm:$0xff] 0.0
      %106 = vst [vmem:[#allocation2 + $0xe0] sm:$0xff] 0.0
      %107 = vst [vmem:[#allocation2 + $0xe8] sm:$0xff] 0.0
      %108 = vst [vmem:[#allocation2 + $0xf0] sm:$0xff] 0.0
      %109 = vst [vmem:[#allocation2 + $0xf8] sm:$0xff] 0.0
    $region29: #{tpu_custom_call.1} parent=1 // pred_fallthru
      _
    %v110 = vld [vmem:[#allocation6] sm:$0xff]
    %v111 = vld [vmem:[#allocation6 + $0x8] sm:$0xff]
    %v112 = vld [vmem:[#allocation6 + $0x10] sm:$0xff]
    %v113 = vld [vmem:[#allocation6 + $0x18] sm:$0xff]
    %v114 = vld [vmem:[#allocation6 + $0x20] sm:$0xff]
    %v115 = vld [vmem:[#allocation6 + $0x28] sm:$0xff]
    %v116 = vld [vmem:[#allocation6 + $0x30] sm:$0xff]
    %v117 = vld [vmem:[#allocation6 + $0x38] sm:$0xff]
    %v118 = vld [vmem:[#allocation3] sm:$0xff]
    %v119 = vld [vmem:[#allocation3 + $0x8] sm:$0xff]
    %v120 = vld [vmem:[#allocation3 + $0x10] sm:$0xff]
    %v121 = vld [vmem:[#allocation3 + $0x18] sm:$0xff]
    %122 = vxpose.xlu0.b32.start [1/16] %v110, 128
    %123 = vxpose.xlu0.b32.cont [2/16] %v112, 128
    %124 = vxpose.xlu0.b32.cont [3/16] %v114, 128
    %125 = vxpose.xlu0.b32.cont [4/16] %v116, 128
    %126 = vxpose.xlu0.b32.cont [5/16] 0.0, 128
    %127 = vxpose.xlu0.b32.cont [6/16] 0.0, 128
    %128 = vxpose.xlu0.b32.cont [7/16] 0.0, 128
    %129 = vxpose.xlu0.b32.cont [8/16] 0.0, 128
    %130 = vxpose.xlu0.b32.cont [9/16] 0.0, 128
    %131 = vxpose.xlu0.b32.cont [10/16] 0.0, 128
    %132 = vxpose.xlu0.b32.cont [11/16] 0.0, 128
    %133 = vxpose.xlu0.b32.cont [12/16] 0.0, 128
    %134 = vxpose.xlu0.b32.cont [13/16] 0.0, 128
    %135 = vxpose.xlu0.b32.cont [14/16] 0.0, 128
    %136 = vxpose.xlu0.b32.cont [15/16] 0.0, 128
    %137 = vxpose.xlu0.b32.end [16/16] 0.0, 128
    %v138 = vpop.trf.xlu0
    %v139 = vpop.trf.xlu0
    %v140 = vpop.trf.xlu0
    %v141 = vpop.trf.xlu0
    %v142 = vpop.trf.xlu0
    %v143 = vpop.trf.xlu0
    %v144 = vpop.trf.xlu0
    %v145 = vpop.trf.xlu0
    %v146 = vpop.trf.xlu0
    %v147 = vpop.trf.xlu0
    %v148 = vpop.trf.xlu0
    %v149 = vpop.trf.xlu0
    %v150 = vpop.trf.xlu0
    %v151 = vpop.trf.xlu0
    %v152 = vpop.trf.xlu0
    %v153 = vpop.trf.xlu0
    %154 = vxpose.xlu0.b32.start [1/16] %v111, 128
    %155 = vxpose.xlu0.b32.cont [2/16] %v113, 128
    %156 = vxpose.xlu0.b32.cont [3/16] %v115, 128
    %157 = vxpose.xlu0.b32.cont [4/16] %v117, 128
    %158 = vxpose.xlu0.b32.cont [5/16] 0.0, 128
    %159 = vxpose.xlu0.b32.cont [6/16] 0.0, 128
    %160 = vxpose.xlu0.b32.cont [7/16] 0.0, 128
    %161 = vxpose.xlu0.b32.cont [8/16] 0.0, 128
    %162 = vxpose.xlu0.b32.cont [9/16] 0.0, 128
    %163 = vxpose.xlu0.b32.cont [10/16] 0.0, 128
    %164 = vxpose.xlu0.b32.cont [11/16] 0.0, 128
    %165 = vxpose.xlu0.b32.cont [12/16] 0.0, 128
    %166 = vxpose.xlu0.b32.cont [13/16] 0.0, 128
    %167 = vxpose.xlu0.b32.cont [14/16] 0.0, 128
    %168 = vxpose.xlu0.b32.cont [15/16] 0.0, 128
    %169 = vxpose.xlu0.b32.end [16/16] 0.0, 128
    %v170 = vpop.trf.xlu0
    %v171 = vpop.trf.xlu0
    %v172 = vpop.trf.xlu0
    %v173 = vpop.trf.xlu0
    %v174 = vpop.trf.xlu0
    %v175 = vpop.trf.xlu0
    %v176 = vpop.trf.xlu0
    %v177 = vpop.trf.xlu0
    %v178 = vpop.trf.xlu0
    %v179 = vpop.trf.xlu0
    %v180 = vpop.trf.xlu0
    %v181 = vpop.trf.xlu0
    %v182 = vpop.trf.xlu0
    %v183 = vpop.trf.xlu0
    %v184 = vpop.trf.xlu0
    %v185 = vpop.trf.xlu0
    %vm186 = vcmask 261120
    %v188 = vsel %vm186, %v138, 0
    %v191 = vsel %vm186, %v139, 0
    %v194 = vsel %vm186, %v140, 0
    %v197 = vsel %vm186, %v141, 0
    %v200 = vsel %vm186, %v142, 0
    %v203 = vsel %vm186, %v143, 0
    %v206 = vsel %vm186, %v144, 0
    %v209 = vsel %vm186, %v145, 0
    %v212 = vsel %vm186, %v146, 0
    %v215 = vsel %vm186, %v147, 0
    %v218 = vsel %vm186, %v148, 0
    %v221 = vsel %vm186, %v149, 0
    %v224 = vsel %vm186, %v150, 0
    %v227 = vsel %vm186, %v151, 0
    %v230 = vsel %vm186, %v152, 0
    %v233 = vsel %vm186, %v153, 0
    %v236 = vsel %vm186, %v170, 0
    %v239 = vsel %vm186, %v171, 0
    %v242 = vsel %vm186, %v172, 0
    %v245 = vsel %vm186, %v173, 0
    %v248 = vsel %vm186, %v174, 0
    %v251 = vsel %vm186, %v175, 0
    %v254 = vsel %vm186, %v176, 0
    %v257 = vsel %vm186, %v177, 0
    %v260 = vsel %vm186, %v178, 0
    %v263 = vsel %vm186, %v179, 0
    %v266 = vsel %vm186, %v180, 0
    %v269 = vsel %vm186, %v181, 0
    %v272 = vsel %vm186, %v182, 0
    %v275 = vsel %vm186, %v183, 0
    %v278 = vsel %vm186, %v184, 0
    %v281 = vsel %vm186, %v185, 0
    %283 = vmatpush.msra.mxu0 0.0
    %284 = vmatpush.msra.mxu0 0.0
    %285 = vmatpush.msra.mxu0 0.0
    %286 = vmatpush.msra.mxu0 0.0
    %287 = vmatpush.msra.mxu0 0.0
    %288 = vmatpush.msra.mxu0 0.0
    %289 = vmatpush.msra.mxu0 0.0
    %290 = vmatpush.msra.mxu0 0.0
    %291 = vmatpush.msra.mxu0 0.0
    %292 = vmatpush.msra.mxu0 0.0
    %293 = vmatpush.msra.mxu0 0.0
    %294 = vmatpush.msra.mxu0 0.0
    %295 = vmatpush.msra.mxu0 %v121
    %296 = vmatpush.msra.mxu0 %v120
    %297 = vmatpush.msra.mxu0 %v119
    %298 = vmatpush.msra.mxu0 %v118
    %299 = vmatmul.f32.gmra.mxu0 %v188
    %v300 = vpop.f32.mrf.mxu0
    %v301 = vadd.f32 0.0, %v300
    %302 = vmatmul.f32.gmra.mxu0 %v191
    %v303 = vpop.f32.mrf.mxu0
    %v304 = vadd.f32 0.0, %v303
    %305 = vmatmul.f32.gmra.mxu0 %v194
    %v306 = vpop.f32.mrf.mxu0
    %v307 = vadd.f32 0.0, %v306
    %308 = vmatmul.f32.gmra.mxu0 %v197
    %v309 = vpop.f32.mrf.mxu0
    %v310 = vadd.f32 0.0, %v309
    %311 = vmatmul.f32.gmra.mxu0 %v200
    %v312 = vpop.f32.mrf.mxu0
    %v313 = vadd.f32 0.0, %v312
    %314 = vmatmul.f32.gmra.mxu0 %v203
    %v315 = vpop.f32.mrf.mxu0
    %v316 = vadd.f32 0.0, %v315
    %317 = vmatmul.f32.gmra.mxu0 %v206
    %v318 = vpop.f32.mrf.mxu0
    %v319 = vadd.f32 0.0, %v318
    %320 = vmatmul.f32.gmra.mxu0 %v209
    %v321 = vpop.f32.mrf.mxu0
    %v322 = vadd.f32 0.0, %v321
    %323 = vmatmul.f32.gmra.mxu0 %v212
    %v324 = vpop.f32.mrf.mxu0
    %v325 = vadd.f32 0.0, %v324
    %326 = vmatmul.f32.gmra.mxu0 %v215
    %v327 = vpop.f32.mrf.mxu0
    %v328 = vadd.f32 0.0, %v327
    %329 = vmatmul.f32.gmra.mxu0 %v218
    %v330 = vpop.f32.mrf.mxu0
    %v331 = vadd.f32 0.0, %v330
    %332 = vmatmul.f32.gmra.mxu0 %v221
    %v333 = vpop.f32.mrf.mxu0
    %v334 = vadd.f32 0.0, %v333
    %335 = vmatmul.f32.gmra.mxu0 %v224
    %v336 = vpop.f32.mrf.mxu0
    %v337 = vadd.f32 0.0, %v336
    %338 = vmatmul.f32.gmra.mxu0 %v227
    %v339 = vpop.f32.mrf.mxu0
    %v340 = vadd.f32 0.0, %v339
    %341 = vmatmul.f32.gmra.mxu0 %v230
    %v342 = vpop.f32.mrf.mxu0
    %v343 = vadd.f32 0.0, %v342
    %344 = vmatmul.f32.gmra.mxu0 %v233
    %v345 = vpop.f32.mrf.mxu0
    %v346 = vadd.f32 0.0, %v345
    %347 = vmatmul.f32.gmra.mxu0 %v236
    %v348 = vpop.f32.mrf.mxu0
    %v349 = vadd.f32 0.0, %v348
    %350 = vmatmul.f32.gmra.mxu0 %v239
    %v351 = vpop.f32.mrf.mxu0
    %v352 = vadd.f32 0.0, %v351
    %353 = vmatmul.f32.gmra.mxu0 %v242
    %v354 = vpop.f32.mrf.mxu0
    %v355 = vadd.f32 0.0, %v354
    %356 = vmatmul.f32.gmra.mxu0 %v245
    %v357 = vpop.f32.mrf.mxu0
    %v358 = vadd.f32 0.0, %v357
    %359 = vmatmul.f32.gmra.mxu0 %v248
    %v360 = vpop.f32.mrf.mxu0
    %v361 = vadd.f32 0.0, %v360
    %362 = vmatmul.f32.gmra.mxu0 %v251
    %v363 = vpop.f32.mrf.mxu0
    %v364 = vadd.f32 0.0, %v363
    %365 = vmatmul.f32.gmra.mxu0 %v254
    %v366 = vpop.f32.mrf.mxu0
    %v367 = vadd.f32 0.0, %v366
    %368 = vmatmul.f32.gmra.mxu0 %v257
    %v369 = vpop.f32.mrf.mxu0
    %v370 = vadd.f32 0.0, %v369
    %371 = vmatmul.f32.gmra.mxu0 %v260
    %v372 = vpop.f32.mrf.mxu0
    %v373 = vadd.f32 0.0, %v372
    %374 = vmatmul.f32.gmra.mxu0 %v263
    %v375 = vpop.f32.mrf.mxu0
    %v376 = vadd.f32 0.0, %v375
    %377 = vmatmul.f32.gmra.mxu0 %v266
    %v378 = vpop.f32.mrf.mxu0
    %v379 = vadd.f32 0.0, %v378
    %380 = vmatmul.f32.gmra.mxu0 %v269
    %v381 = vpop.f32.mrf.mxu0
    %v382 = vadd.f32 0.0, %v381
    %383 = vmatmul.f32.gmra.mxu0 %v272
    %v384 = vpop.f32.mrf.mxu0
    %v385 = vadd.f32 0.0, %v384
    %386 = vmatmul.f32.gmra.mxu0 %v275
    %v387 = vpop.f32.mrf.mxu0
    %v388 = vadd.f32 0.0, %v387
    %389 = vmatmul.f32.gmra.mxu0 %v278
    %v390 = vpop.f32.mrf.mxu0
    %v391 = vadd.f32 0.0, %v390
    %392 = vmatmul.f32.gmra.mxu0 %v281
    %v393 = vpop.f32.mrf.mxu0
    %v394 = vadd.f32 0.0, %v393
    %395 = vdwg.mxu0
    %v396 = vmax.f32 %v301, -100.0
    %v397 = vmax.f32 %v304, -100.0
    %v398 = vmax.f32 %v307, -100.0
    %v399 = vmax.f32 %v310, -100.0
    %v400 = vmax.f32 %v313, -100.0
    %v401 = vmax.f32 %v316, -100.0
    %v402 = vmax.f32 %v319, -100.0
    %v403 = vmax.f32 %v322, -100.0
    %v404 = vmax.f32 %v325, -100.0
    %v405 = vmax.f32 %v328, -100.0
    %v406 = vmax.f32 %v331, -100.0
    %v407 = vmax.f32 %v334, -100.0
    %v408 = vmax.f32 %v337, -100.0
    %v409 = vmax.f32 %v340, -100.0
    %v410 = vmax.f32 %v343, -100.0
    %v411 = vmax.f32 %v346, -100.0
    %v412 = vmax.f32 %v349, -100.0
    %v413 = vmax.f32 %v352, -100.0
    %v414 = vmax.f32 %v355, -100.0
    %v415 = vmax.f32 %v358, -100.0
    %v416 = vmax.f32 %v361, -100.0
    %v417 = vmax.f32 %v364, -100.0
    %v418 = vmax.f32 %v367, -100.0
    %v419 = vmax.f32 %v370, -100.0
    %v420 = vmax.f32 %v373, -100.0
    %v421 = vmax.f32 %v376, -100.0
    %v422 = vmax.f32 %v379, -100.0
    %v423 = vmax.f32 %v382, -100.0
    %v424 = vmax.f32 %v385, -100.0
    %v425 = vmax.f32 %v388, -100.0
    %v426 = vmax.f32 %v391, -100.0
    %v427 = vmax.f32 %v394, -100.0
    %v428 = vmin.f32 %v396, 50.0
    %v429 = vmin.f32 %v397, 50.0
    %v430 = vmin.f32 %v398, 50.0
    %v431 = vmin.f32 %v399, 50.0
    %v432 = vmin.f32 %v400, 50.0
    %v433 = vmin.f32 %v401, 50.0
    %v434 = vmin.f32 %v402, 50.0
    %v435 = vmin.f32 %v403, 50.0
    %v436 = vmin.f32 %v404, 50.0
    %v437 = vmin.f32 %v405, 50.0
    %v438 = vmin.f32 %v406, 50.0
    %v439 = vmin.f32 %v407, 50.0
    %v440 = vmin.f32 %v408, 50.0
    %v441 = vmin.f32 %v409, 50.0
    %v442 = vmin.f32 %v410, 50.0
    %v443 = vmin.f32 %v411, 50.0
    %v444 = vmin.f32 %v412, 50.0
    %v445 = vmin.f32 %v413, 50.0
    %v446 = vmin.f32 %v414, 50.0
    %v447 = vmin.f32 %v415, 50.0
    %v448 = vmin.f32 %v416, 50.0
    %v449 = vmin.f32 %v417, 50.0
    %v450 = vmin.f32 %v418, 50.0
    %v451 = vmin.f32 %v419, 50.0
    %v452 = vmin.f32 %v420, 50.0
    %v453 = vmin.f32 %v421, 50.0
    %v454 = vmin.f32 %v422, 50.0
    %v455 = vmin.f32 %v423, 50.0
    %v456 = vmin.f32 %v424, 50.0
    %v457 = vmin.f32 %v425, 50.0
    %v458 = vmin.f32 %v426, 50.0
    %v459 = vmin.f32 %v427, 50.0
    %v460 = vld [vmem:[#allocation8] sm:$0xff]
    %v461 = vld [vmem:[#allocation8 + $0x8] sm:$0xff]
    %v462 = vld [vmem:[#allocation8 + $0x10] sm:$0xff]
    %v463 = vld [vmem:[#allocation8 + $0x18] sm:$0xff]
    %v464 = vld [vmem:[#allocation8 + $0x20] sm:$0xff]
    %v465 = vld [vmem:[#allocation8 + $0x28] sm:$0xff]
    %v466 = vld [vmem:[#allocation8 + $0x30] sm:$0xff]
    %v467 = vld [vmem:[#allocation8 + $0x38] sm:$0xff]
    %v468 = vunpack.c.0.s8 %v460
    %v469 = vunpack.c.1.s8 %v460
    %v470 = vunpack.c.2.s8 %v460
    %v471 = vunpack.c.3.s8 %v460
    %v472 = vunpack.c.0.s8 %v461
    %v473 = vunpack.c.1.s8 %v461
    %v474 = vunpack.c.2.s8 %v461
    %v475 = vunpack.c.3.s8 %v461
    %v476 = vunpack.c.0.s8 %v462
    %v477 = vunpack.c.1.s8 %v462
    %v478 = vunpack.c.2.s8 %v462
    %v479 = vunpack.c.3.s8 %v462
    %v480 = vunpack.c.0.s8 %v463
    %v481 = vunpack.c.1.s8 %v463
    %v482 = vunpack.c.2.s8 %v463
    %v483 = vunpack.c.3.s8 %v463
    %v484 = vunpack.c.0.s8 %v464
    %v485 = vunpack.c.1.s8 %v464
    %v486 = vunpack.c.2.s8 %v464
    %v487 = vunpack.c.3.s8 %v464
    %v488 = vunpack.c.0.s8 %v465
    %v489 = vunpack.c.1.s8 %v465
    %v490 = vunpack.c.2.s8 %v465
    %v491 = vunpack.c.3.s8 %v465
    %v492 = vunpack.c.0.s8 %v466
    %v493 = vunpack.c.1.s8 %v466
    %v494 = vunpack.c.2.s8 %v466
    %v495 = vunpack.c.3.s8 %v466
    %v496 = vunpack.c.0.s8 %v467
    %v497 = vunpack.c.1.s8 %v467
    %v498 = vunpack.c.2.s8 %v467
    %v499 = vunpack.c.3.s8 %v467
    %v500 = vcvt.s32.f32 %v468
    %v501 = vcvt.s32.f32 %v469
    %v502 = vcvt.s32.f32 %v470
    %v503 = vcvt.s32.f32 %v471
    %v504 = vcvt.s32.f32 %v472
    %v505 = vcvt.s32.f32 %v473
    %v506 = vcvt.s32.f32 %v474
    %v507 = vcvt.s32.f32 %v475
    %v508 = vcvt.s32.f32 %v476
    %v509 = vcvt.s32.f32 %v477
    %v510 = vcvt.s32.f32 %v478
    %v511 = vcvt.s32.f32 %v479
    %v512 = vcvt.s32.f32 %v480
    %v513 = vcvt.s32.f32 %v481
    %v514 = vcvt.s32.f32 %v482
    %v515 = vcvt.s32.f32 %v483
    %v516 = vcvt.s32.f32 %v484
    %v517 = vcvt.s32.f32 %v485
    %v518 = vcvt.s32.f32 %v486
    %v519 = vcvt.s32.f32 %v487
    %v520 = vcvt.s32.f32 %v488
    %v521 = vcvt.s32.f32 %v489
    %v522 = vcvt.s32.f32 %v490
    %v523 = vcvt.s32.f32 %v491
    %v524 = vcvt.s32.f32 %v492
    %v525 = vcvt.s32.f32 %v493
    %v526 = vcvt.s32.f32 %v494
    %v527 = vcvt.s32.f32 %v495
    %v528 = vcvt.s32.f32 %v496
    %v529 = vcvt.s32.f32 %v497
    %v530 = vcvt.s32.f32 %v498
    %v531 = vcvt.s32.f32 %v499
    %v532 = vld [vmem:[#allocation2] sm:$0xff]
    %v533 = vld [vmem:[#allocation2 + $0x8] sm:$0xff]
    %v534 = vld [vmem:[#allocation2 + $0x10] sm:$0xff]
    %v535 = vld [vmem:[#allocation2 + $0x18] sm:$0xff]
    %v536 = vld [vmem:[#allocation2 + $0x20] sm:$0xff]
    %v537 = vld [vmem:[#allocation2 + $0x28] sm:$0xff]
    %v538 = vld [vmem:[#allocation2 + $0x30] sm:$0xff]
    %v539 = vld [vmem:[#allocation2 + $0x38] sm:$0xff]
    %v540 = vld [vmem:[#allocation2 + $0x40] sm:$0xff]
    %v541 = vld [vmem:[#allocation2 + $0x48] sm:$0xff]
    %v542 = vld [vmem:[#allocation2 + $0x50] sm:$0xff]
    %v543 = vld [vmem:[#allocation2 + $0x58] sm:$0xff]
    %v544 = vld [vmem:[#allocation2 + $0x60] sm:$0xff]
    %v545 = vld [vmem:[#allocation2 + $0x68] sm:$0xff]
    %v546 = vld [vmem:[#allocation2 + $0x70] sm:$0xff]
    %v547 = vld [vmem:[#allocation2 + $0x78] sm:$0xff]
    %v548 = vld [vmem:[#allocation2 + $0x80] sm:$0xff]
    %v549 = vld [vmem:[#allocation2 + $0x88] sm:$0xff]
    %v550 = vld [vmem:[#allocation2 + $0x90] sm:$0xff]
    %v551 = vld [vmem:[#allocation2 + $0x98] sm:$0xff]
    %v552 = vld [vmem:[#allocation2 + $0xa0] sm:$0xff]
    %v553 = vld [vmem:[#allocation2 + $0xa8] sm:$0xff]
    %v554 = vld [vmem:[#allocation2 + $0xb0] sm:$0xff]
    %v555 = vld [vmem:[#allocation2 + $0xb8] sm:$0xff]
    %v556 = vld [vmem:[#allocation2 + $0xc0] sm:$0xff]
    %v557 = vld [vmem:[#allocation2 + $0xc8] sm:$0xff]
    %v558 = vld [vmem:[#allocation2 + $0xd0] sm:$0xff]
    %v559 = vld [vmem:[#allocation2 + $0xd8] sm:$0xff]
    %v560 = vld [vmem:[#allocation2 + $0xe0] sm:$0xff]
    %v561 = vld [vmem:[#allocation2 + $0xe8] sm:$0xff]
    %v562 = vld [vmem:[#allocation2 + $0xf0] sm:$0xff]
    %v563 = vld [vmem:[#allocation2 + $0xf8] sm:$0xff]
    %v564 = vmul.f32 %v428, 1.442695
    %v565 = vpow.pop %v564
    %v566 = vmul.f32 %v429, 1.442695
    %v567 = vpow.pop %v566
    %v568 = vmul.f32 %v430, 1.442695
    %v569 = vpow.pop %v568
    %v570 = vmul.f32 %v431, 1.442695
    %v571 = vpow.pop %v570
    %v572 = vmul.f32 %v432, 1.442695
    %v573 = vpow.pop %v572
    %v574 = vmul.f32 %v433, 1.442695
    %v575 = vpow.pop %v574
    %v576 = vmul.f32 %v434, 1.442695
    %v577 = vpow.pop %v576
    %v578 = vmul.f32 %v435, 1.442695
    %v579 = vpow.pop %v578
    %v580 = vmul.f32 %v436, 1.442695
    %v581 = vpow.pop %v580
    %v582 = vmul.f32 %v437, 1.442695
    %v583 = vpow.pop %v582
    %v584 = vmul.f32 %v438, 1.442695
    %v585 = vpow.pop %v584
    %v586 = vmul.f32 %v439, 1.442695
    %v587 = vpow.pop %v586
    %v588 = vmul.f32 %v440, 1.442695
    %v589 = vpow.pop %v588
    %v590 = vmul.f32 %v441, 1.442695
    %v591 = vpow.pop %v590
    %v592 = vmul.f32 %v442, 1.442695
    %v593 = vpow.pop %v592
    %v594 = vmul.f32 %v443, 1.442695
    %v595 = vpow.pop %v594
    %v596 = vmul.f32 %v444, 1.442695
    %v597 = vpow.pop %v596
    %v598 = vmul.f32 %v445, 1.442695
    %v599 = vpow.pop %v598
    %v600 = vmul.f32 %v446, 1.442695
    %v601 = vpow.pop %v600
    %v602 = vmul.f32 %v447, 1.442695
    %v603 = vpow.pop %v602
    %v604 = vmul.f32 %v448, 1.442695
    %v605 = vpow.pop %v604
    %v606 = vmul.f32 %v449, 1.442695
    %v607 = vpow.pop %v606
    %v608 = vmul.f32 %v450, 1.442695
    %v609 = vpow.pop %v608
    %v610 = vmul.f32 %v451, 1.442695
    %v611 = vpow.pop %v610
    %v612 = vmul.f32 %v452, 1.442695
    %v613 = vpow.pop %v612
    %v614 = vmul.f32 %v453, 1.442695
    %v615 = vpow.pop %v614
    %v616 = vmul.f32 %v454, 1.442695
    %v617 = vpow.pop %v616
    %v618 = vmul.f32 %v455, 1.442695
    %v619 = vpow.pop %v618
    %v620 = vmul.f32 %v456, 1.442695
    %v621 = vpow.pop %v620
    %v622 = vmul.f32 %v457, 1.442695
    %v623 = vpow.pop %v622
    %v624 = vmul.f32 %v458, 1.442695
    %v625 = vpow.pop %v624
    %v626 = vmul.f32 %v459, 1.442695
    %v627 = vpow.pop %v626
    %v628 = vadd.f32 %v565, 1.0
    %v629 = vlog2.pop %v628
    %v630 = vmul.f32 %v629, 0.6931472
    %v631 = vmul.f32 -0.5, %v565
    %v632 = vadd.f32 %v631, 1.0
    %v633 = vmul.f32 %v632, %v565
    %v634 = vand.u32 2147483647, %v565
    %vm635 = vcmp.lt.f32.partialorder %v634, 0.0004427343
    %v636 = vsel %vm635, %v633, %v630
    %v637 = vadd.f32 %v567, 1.0
    %v638 = vlog2.pop %v637
    %v639 = vmul.f32 %v638, 0.6931472
    %v640 = vmul.f32 -0.5, %v567
    %v641 = vadd.f32 %v640, 1.0
    %v642 = vmul.f32 %v641, %v567
    %v643 = vand.u32 2147483647, %v567
    %vm644 = vcmp.lt.f32.partialorder %v643, 0.0004427343
    %v645 = vsel %vm644, %v642, %v639
    %v646 = vadd.f32 %v569, 1.0
    %v647 = vlog2.pop %v646
    %v648 = vmul.f32 %v647, 0.6931472
    %v649 = vmul.f32 -0.5, %v569
    %v650 = vadd.f32 %v649, 1.0
    %v651 = vmul.f32 %v650, %v569
    %v652 = vand.u32 2147483647, %v569
    %vm653 = vcmp.lt.f32.partialorder %v652, 0.0004427343
    %v654 = vsel %vm653, %v651, %v648
    %v655 = vadd.f32 %v571, 1.0
    %v656 = vlog2.pop %v655
    %v657 = vmul.f32 %v656, 0.6931472
    %v658 = vmul.f32 -0.5, %v571
    %v659 = vadd.f32 %v658, 1.0
    %v660 = vmul.f32 %v659, %v571
    %v661 = vand.u32 2147483647, %v571
    %vm662 = vcmp.lt.f32.partialorder %v661, 0.0004427343
    %v663 = vsel %vm662, %v660, %v657
    %v664 = vadd.f32 %v573, 1.0
    %v665 = vlog2.pop %v664
    %v666 = vmul.f32 %v665, 0.6931472
    %v667 = vmul.f32 -0.5, %v573
    %v668 = vadd.f32 %v667, 1.0
    %v669 = vmul.f32 %v668, %v573
    %v670 = vand.u32 2147483647, %v573
    %vm671 = vcmp.lt.f32.partialorder %v670, 0.0004427343
    %v672 = vsel %vm671, %v669, %v666
    %v673 = vadd.f32 %v575, 1.0
    %v674 = vlog2.pop %v673
    %v675 = vmul.f32 %v674, 0.6931472
    %v676 = vmul.f32 -0.5, %v575
    %v677 = vadd.f32 %v676, 1.0
    %v678 = vmul.f32 %v677, %v575
    %v679 = vand.u32 2147483647, %v575
    %vm680 = vcmp.lt.f32.partialorder %v679, 0.0004427343
    %v681 = vsel %vm680, %v678, %v675
    %v682 = vadd.f32 %v577, 1.0
    %v683 = vlog2.pop %v682
    %v684 = vmul.f32 %v683, 0.6931472
    %v685 = vmul.f32 -0.5, %v577
    %v686 = vadd.f32 %v685, 1.0
    %v687 = vmul.f32 %v686, %v577
    %v688 = vand.u32 2147483647, %v577
    %vm689 = vcmp.lt.f32.partialorder %v688, 0.0004427343
    %v690 = vsel %vm689, %v687, %v684
    %v691 = vadd.f32 %v579, 1.0
    %v692 = vlog2.pop %v691
    %v693 = vmul.f32 %v692, 0.6931472
    %v694 = vmul.f32 -0.5, %v579
    %v695 = vadd.f32 %v694, 1.0
    %v696 = vmul.f32 %v695, %v579
    %v697 = vand.u32 2147483647, %v579
    %vm698 = vcmp.lt.f32.partialorder %v697, 0.0004427343
    %v699 = vsel %vm698, %v696, %v693
    %v700 = vadd.f32 %v581, 1.0
    %v701 = vlog2.pop %v700
    %v702 = vmul.f32 %v701, 0.6931472
    %v703 = vmul.f32 -0.5, %v581
    %v704 = vadd.f32 %v703, 1.0
    %v705 = vmul.f32 %v704, %v581
    %v706 = vand.u32 2147483647, %v581
    %vm707 = vcmp.lt.f32.partialorder %v706, 0.0004427343
    %v708 = vsel %vm707, %v705, %v702
    %v709 = vadd.f32 %v583, 1.0
    %v710 = vlog2.pop %v709
    %v711 = vmul.f32 %v710, 0.6931472
    %v712 = vmul.f32 -0.5, %v583
    %v713 = vadd.f32 %v712, 1.0
    %v714 = vmul.f32 %v713, %v583
    %v715 = vand.u32 2147483647, %v583
    %vm716 = vcmp.lt.f32.partialorder %v715, 0.0004427343
    %v717 = vsel %vm716, %v714, %v711
    %v718 = vadd.f32 %v585, 1.0
    %v719 = vlog2.pop %v718
    %v720 = vmul.f32 %v719, 0.6931472
    %v721 = vmul.f32 -0.5, %v585
    %v722 = vadd.f32 %v721, 1.0
    %v723 = vmul.f32 %v722, %v585
    %v724 = vand.u32 2147483647, %v585
    %vm725 = vcmp.lt.f32.partialorder %v724, 0.0004427343
    %v726 = vsel %vm725, %v723, %v720
    %v727 = vadd.f32 %v587, 1.0
    %v728 = vlog2.pop %v727
    %v729 = vmul.f32 %v728, 0.6931472
    %v730 = vmul.f32 -0.5, %v587
    %v731 = vadd.f32 %v730, 1.0
    %v732 = vmul.f32 %v731, %v587
    %v733 = vand.u32 2147483647, %v587
    %vm734 = vcmp.lt.f32.partialorder %v733, 0.0004427343
    %v735 = vsel %vm734, %v732, %v729
    %v736 = vadd.f32 %v589, 1.0
    %v737 = vlog2.pop %v736
    %v738 = vmul.f32 %v737, 0.6931472
    %v739 = vmul.f32 -0.5, %v589
    %v740 = vadd.f32 %v739, 1.0
    %v741 = vmul.f32 %v740, %v589
    %v742 = vand.u32 2147483647, %v589
    %vm743 = vcmp.lt.f32.partialorder %v742, 0.0004427343
    %v744 = vsel %vm743, %v741, %v738
    %v745 = vadd.f32 %v591, 1.0
    %v746 = vlog2.pop %v745
    %v747 = vmul.f32 %v746, 0.6931472
    %v748 = vmul.f32 -0.5, %v591
    %v749 = vadd.f32 %v748, 1.0
    %v750 = vmul.f32 %v749, %v591
    %v751 = vand.u32 2147483647, %v591
    %vm752 = vcmp.lt.f32.partialorder %v751, 0.0004427343
    %v753 = vsel %vm752, %v750, %v747
    %v754 = vadd.f32 %v593, 1.0
    %v755 = vlog2.pop %v754
    %v756 = vmul.f32 %v755, 0.6931472
    %v757 = vmul.f32 -0.5, %v593
    %v758 = vadd.f32 %v757, 1.0
    %v759 = vmul.f32 %v758, %v593
    %v760 = vand.u32 2147483647, %v593
    %vm761 = vcmp.lt.f32.partialorder %v760, 0.0004427343
    %v762 = vsel %vm761, %v759, %v756
    %v763 = vadd.f32 %v595, 1.0
    %v764 = vlog2.pop %v763
    %v765 = vmul.f32 %v764, 0.6931472
    %v766 = vmul.f32 -0.5, %v595
    %v767 = vadd.f32 %v766, 1.0
    %v768 = vmul.f32 %v767, %v595
    %v769 = vand.u32 2147483647, %v595
    %vm770 = vcmp.lt.f32.partialorder %v769, 0.0004427343
    %v771 = vsel %vm770, %v768, %v765
    %v772 = vadd.f32 %v597, 1.0
    %v773 = vlog2.pop %v772
    %v774 = vmul.f32 %v773, 0.6931472
    %v775 = vmul.f32 -0.5, %v597
    %v776 = vadd.f32 %v775, 1.0
    %v777 = vmul.f32 %v776, %v597
    %v778 = vand.u32 2147483647, %v597
    %vm779 = vcmp.lt.f32.partialorder %v778, 0.0004427343
    %v780 = vsel %vm779, %v777, %v774
    %v781 = vadd.f32 %v599, 1.0
    %v782 = vlog2.pop %v781
    %v783 = vmul.f32 %v782, 0.6931472
    %v784 = vmul.f32 -0.5, %v599
    %v785 = vadd.f32 %v784, 1.0
    %v786 = vmul.f32 %v785, %v599
    %v787 = vand.u32 2147483647, %v599
    %vm788 = vcmp.lt.f32.partialorder %v787, 0.0004427343
    %v789 = vsel %vm788, %v786, %v783
    %v790 = vadd.f32 %v601, 1.0
    %v791 = vlog2.pop %v790
    %v792 = vmul.f32 %v791, 0.6931472
    %v793 = vmul.f32 -0.5, %v601
    %v794 = vadd.f32 %v793, 1.0
    %v795 = vmul.f32 %v794, %v601
    %v796 = vand.u32 2147483647, %v601
    %vm797 = vcmp.lt.f32.partialorder %v796, 0.0004427343
    %v798 = vsel %vm797, %v795, %v792
    %v799 = vadd.f32 %v603, 1.0
    %v800 = vlog2.pop %v799
    %v801 = vmul.f32 %v800, 0.6931472
    %v802 = vmul.f32 -0.5, %v603
    %v803 = vadd.f32 %v802, 1.0
    %v804 = vmul.f32 %v803, %v603
    %v805 = vand.u32 2147483647, %v603
    %vm806 = vcmp.lt.f32.partialorder %v805, 0.0004427343
    %v807 = vsel %vm806, %v804, %v801
    %v808 = vadd.f32 %v605, 1.0
    %v809 = vlog2.pop %v808
    %v810 = vmul.f32 %v809, 0.6931472
    %v811 = vmul.f32 -0.5, %v605
    %v812 = vadd.f32 %v811, 1.0
    %v813 = vmul.f32 %v812, %v605
    %v814 = vand.u32 2147483647, %v605
    %vm815 = vcmp.lt.f32.partialorder %v814, 0.0004427343
    %v816 = vsel %vm815, %v813, %v810
    %v817 = vadd.f32 %v607, 1.0
    %v818 = vlog2.pop %v817
    %v819 = vmul.f32 %v818, 0.6931472
    %v820 = vmul.f32 -0.5, %v607
    %v821 = vadd.f32 %v820, 1.0
    %v822 = vmul.f32 %v821, %v607
    %v823 = vand.u32 2147483647, %v607
    %vm824 = vcmp.lt.f32.partialorder %v823, 0.0004427343
    %v825 = vsel %vm824, %v822, %v819
    %v826 = vadd.f32 %v609, 1.0
    %v827 = vlog2.pop %v826
    %v828 = vmul.f32 %v827, 0.6931472
    %v829 = vmul.f32 -0.5, %v609
    %v830 = vadd.f32 %v829, 1.0
    %v831 = vmul.f32 %v830, %v609
    %v832 = vand.u32 2147483647, %v609
    %vm833 = vcmp.lt.f32.partialorder %v832, 0.0004427343
    %v834 = vsel %vm833, %v831, %v828
    %v835 = vadd.f32 %v611, 1.0
    %v836 = vlog2.pop %v835
    %v837 = vmul.f32 %v836, 0.6931472
    %v838 = vmul.f32 -0.5, %v611
    %v839 = vadd.f32 %v838, 1.0
    %v840 = vmul.f32 %v839, %v611
    %v841 = vand.u32 2147483647, %v611
    %vm842 = vcmp.lt.f32.partialorder %v841, 0.0004427343
    %v843 = vsel %vm842, %v840, %v837
    %v844 = vadd.f32 %v613, 1.0
    %v845 = vlog2.pop %v844
    %v846 = vmul.f32 %v845, 0.6931472
    %v847 = vmul.f32 -0.5, %v613
    %v848 = vadd.f32 %v847, 1.0
    %v849 = vmul.f32 %v848, %v613
    %v850 = vand.u32 2147483647, %v613
    %vm851 = vcmp.lt.f32.partialorder %v850, 0.0004427343
    %v852 = vsel %vm851, %v849, %v846
    %v853 = vadd.f32 %v615, 1.0
    %v854 = vlog2.pop %v853
    %v855 = vmul.f32 %v854, 0.6931472
    %v856 = vmul.f32 -0.5, %v615
    %v857 = vadd.f32 %v856, 1.0
    %v858 = vmul.f32 %v857, %v615
    %v859 = vand.u32 2147483647, %v615
    %vm860 = vcmp.lt.f32.partialorder %v859, 0.0004427343
    %v861 = vsel %vm860, %v858, %v855
    %v862 = vadd.f32 %v617, 1.0
    %v863 = vlog2.pop %v862
    %v864 = vmul.f32 %v863, 0.6931472
    %v865 = vmul.f32 -0.5, %v617
    %v866 = vadd.f32 %v865, 1.0
    %v867 = vmul.f32 %v866, %v617
    %v868 = vand.u32 2147483647, %v617
    %vm869 = vcmp.lt.f32.partialorder %v868, 0.0004427343
    %v870 = vsel %vm869, %v867, %v864
    %v871 = vadd.f32 %v619, 1.0
    %v872 = vlog2.pop %v871
    %v873 = vmul.f32 %v872, 0.6931472
    %v874 = vmul.f32 -0.5, %v619
    %v875 = vadd.f32 %v874, 1.0
    %v876 = vmul.f32 %v875, %v619
    %v877 = vand.u32 2147483647, %v619
    %vm878 = vcmp.lt.f32.partialorder %v877, 0.0004427343
    %v879 = vsel %vm878, %v876, %v873
    %v880 = vadd.f32 %v621, 1.0
    %v881 = vlog2.pop %v880
    %v882 = vmul.f32 %v881, 0.6931472
    %v883 = vmul.f32 -0.5, %v621
    %v884 = vadd.f32 %v883, 1.0
    %v885 = vmul.f32 %v884, %v621
    %v886 = vand.u32 2147483647, %v621
    %vm887 = vcmp.lt.f32.partialorder %v886, 0.0004427343
    %v888 = vsel %vm887, %v885, %v882
    %v889 = vadd.f32 %v623, 1.0
    %v890 = vlog2.pop %v889
    %v891 = vmul.f32 %v890, 0.6931472
    %v892 = vmul.f32 -0.5, %v623
    %v893 = vadd.f32 %v892, 1.0
    %v894 = vmul.f32 %v893, %v623
    %v895 = vand.u32 2147483647, %v623
    %vm896 = vcmp.lt.f32.partialorder %v895, 0.0004427343
    %v897 = vsel %vm896, %v894, %v891
    %v898 = vadd.f32 %v625, 1.0
    %v899 = vlog2.pop %v898
    %v900 = vmul.f32 %v899, 0.6931472
    %v901 = vmul.f32 -0.5, %v625
    %v902 = vadd.f32 %v901, 1.0
    %v903 = vmul.f32 %v902, %v625
    %v904 = vand.u32 2147483647, %v625
    %vm905 = vcmp.lt.f32.partialorder %v904, 0.0004427343
    %v906 = vsel %vm905, %v903, %v900
    %v907 = vadd.f32 %v627, 1.0
    %v908 = vlog2.pop %v907
    %v909 = vmul.f32 %v908, 0.6931472
    %v910 = vmul.f32 -0.5, %v627
    %v911 = vadd.f32 %v910, 1.0
    %v912 = vmul.f32 %v911, %v627
    %v913 = vand.u32 2147483647, %v627
    %vm914 = vcmp.lt.f32.partialorder %v913, 0.0004427343
    %v915 = vsel %vm914, %v912, %v909
    %v916 = vmul.f32 %v500, %v428
    %v917 = vmul.f32 %v501, %v429
    %v918 = vmul.f32 %v502, %v430
    %v919 = vmul.f32 %v503, %v431
    %v920 = vmul.f32 %v504, %v432
    %v921 = vmul.f32 %v505, %v433
    %v922 = vmul.f32 %v506, %v434
    %v923 = vmul.f32 %v507, %v435
    %v924 = vmul.f32 %v508, %v436
    %v925 = vmul.f32 %v509, %v437
    %v926 = vmul.f32 %v510, %v438
    %v927 = vmul.f32 %v511, %v439
    %v928 = vmul.f32 %v512, %v440
    %v929 = vmul.f32 %v513, %v441
    %v930 = vmul.f32 %v514, %v442
    %v931 = vmul.f32 %v515, %v443
    %v932 = vmul.f32 %v516, %v444
    %v933 = vmul.f32 %v517, %v445
    %v934 = vmul.f32 %v518, %v446
    %v935 = vmul.f32 %v519, %v447
    %v936 = vmul.f32 %v520, %v448
    %v937 = vmul.f32 %v521, %v449
    %v938 = vmul.f32 %v522, %v450
    %v939 = vmul.f32 %v523, %v451
    %v940 = vmul.f32 %v524, %v452
    %v941 = vmul.f32 %v525, %v453
    %v942 = vmul.f32 %v526, %v454
    %v943 = vmul.f32 %v527, %v455
    %v944 = vmul.f32 %v528, %v456
    %v945 = vmul.f32 %v529, %v457
    %v946 = vmul.f32 %v530, %v458
    %v947 = vmul.f32 %v531, %v459
    %v948 = vsub.f32 %v636, %v916
    %v949 = vsub.f32 %v645, %v917
    %v950 = vsub.f32 %v654, %v918
    %v951 = vsub.f32 %v663, %v919
    %v952 = vsub.f32 %v672, %v920
    %v953 = vsub.f32 %v681, %v921
    %v954 = vsub.f32 %v690, %v922
    %v955 = vsub.f32 %v699, %v923
    %v956 = vsub.f32 %v708, %v924
    %v957 = vsub.f32 %v717, %v925
    %v958 = vsub.f32 %v726, %v926
    %v959 = vsub.f32 %v735, %v927
    %v960 = vsub.f32 %v744, %v928
    %v961 = vsub.f32 %v753, %v929
    %v962 = vsub.f32 %v762, %v930
    %v963 = vsub.f32 %v771, %v931
    %v964 = vsub.f32 %v780, %v932
    %v965 = vsub.f32 %v789, %v933
    %v966 = vsub.f32 %v798, %v934
    %v967 = vsub.f32 %v807, %v935
    %v968 = vsub.f32 %v816, %v936
    %v969 = vsub.f32 %v825, %v937
    %v970 = vsub.f32 %v834, %v938
    %v971 = vsub.f32 %v843, %v939
    %v972 = vsub.f32 %v852, %v940
    %v973 = vsub.f32 %v861, %v941
    %v974 = vsub.f32 %v870, %v942
    %v975 = vsub.f32 %v879, %v943
    %v976 = vsub.f32 %v888, %v944
    %v977 = vsub.f32 %v897, %v945
    %v978 = vsub.f32 %v906, %v946
    %v979 = vsub.f32 %v915, %v947
    %v980 = vadd.f32 %v532, %v948
    %v981 = vadd.f32 %v533, %v949
    %v982 = vadd.f32 %v534, %v950
    %v983 = vadd.f32 %v535, %v951
    %v984 = vadd.f32 %v536, %v952
    %v985 = vadd.f32 %v537, %v953
    %v986 = vadd.f32 %v538, %v954
    %v987 = vadd.f32 %v539, %v955
    %v988 = vadd.f32 %v540, %v956
    %v989 = vadd.f32 %v541, %v957
    %v990 = vadd.f32 %v542, %v958
    %v991 = vadd.f32 %v543, %v959
    %v992 = vadd.f32 %v544, %v960
    %v993 = vadd.f32 %v545, %v961
    %v994 = vadd.f32 %v546, %v962
    %v995 = vadd.f32 %v547, %v963
    %v996 = vadd.f32 %v548, %v964
    %v997 = vadd.f32 %v549, %v965
    %v998 = vadd.f32 %v550, %v966
    %v999 = vadd.f32 %v551, %v967
    %v1000 = vadd.f32 %v552, %v968
    %v1001 = vadd.f32 %v553, %v969
    %v1002 = vadd.f32 %v554, %v970
    %v1003 = vadd.f32 %v555, %v971
    %v1004 = vadd.f32 %v556, %v972
    %v1005 = vadd.f32 %v557, %v973
    %v1006 = vadd.f32 %v558, %v974
    %v1007 = vadd.f32 %v559, %v975
    %v1008 = vadd.f32 %v560, %v976
    %v1009 = vadd.f32 %v561, %v977
    %v1010 = vadd.f32 %v562, %v978
    %v1011 = vadd.f32 %v563, %v979
    %1012 = vst [vmem:[#allocation2] sm:$0xff] %v980
    %1013 = vst [vmem:[#allocation2 + $0x8] sm:$0xff] %v981
    %1014 = vst [vmem:[#allocation2 + $0x10] sm:$0xff] %v982
    %1015 = vst [vmem:[#allocation2 + $0x18] sm:$0xff] %v983
    %1016 = vst [vmem:[#allocation2 + $0x20] sm:$0xff] %v984
    %1017 = vst [vmem:[#allocation2 + $0x28] sm:$0xff] %v985
    %1018 = vst [vmem:[#allocation2 + $0x30] sm:$0xff] %v986
    %1019 = vst [vmem:[#allocation2 + $0x38] sm:$0xff] %v987
    %1020 = vst [vmem:[#allocation2 + $0x40] sm:$0xff] %v988
    %1021 = vst [vmem:[#allocation2 + $0x48] sm:$0xff] %v989
    %1022 = vst [vmem:[#allocation2 + $0x50] sm:$0xff] %v990
    %1023 = vst [vmem:[#allocation2 + $0x58] sm:$0xff] %v991
    %1024 = vst [vmem:[#allocation2 + $0x60] sm:$0xff] %v992
    %1025 = vst [vmem:[#allocation2 + $0x68] sm:$0xff] %v993
    %1026 = vst [vmem:[#allocation2 + $0x70] sm:$0xff] %v994
    %1027 = vst [vmem:[#allocation2 + $0x78] sm:$0xff] %v995
    %1028 = vst [vmem:[#allocation2 + $0x80] sm:$0xff] %v996
    %1029 = vst [vmem:[#allocation2 + $0x88] sm:$0xff] %v997
    %1030 = vst [vmem:[#allocation2 + $0x90] sm:$0xff] %v998
    %1031 = vst [vmem:[#allocation2 + $0x98] sm:$0xff] %v999
    %1032 = vst [vmem:[#allocation2 + $0xa0] sm:$0xff] %v1000
    %1033 = vst [vmem:[#allocation2 + $0xa8] sm:$0xff] %v1001
    %1034 = vst [vmem:[#allocation2 + $0xb0] sm:$0xff] %v1002
    %1035 = vst [vmem:[#allocation2 + $0xb8] sm:$0xff] %v1003
    %1036 = vst [vmem:[#allocation2 + $0xc0] sm:$0xff] %v1004
    %1037 = vst [vmem:[#allocation2 + $0xc8] sm:$0xff] %v1005
    %1038 = vst [vmem:[#allocation2 + $0xd0] sm:$0xff] %v1006
    %1039 = vst [vmem:[#allocation2 + $0xd8] sm:$0xff] %v1007
    %1040 = vst [vmem:[#allocation2 + $0xe0] sm:$0xff] %v1008
    %1041 = vst [vmem:[#allocation2 + $0xe8] sm:$0xff] %v1009
    %1042 = vst [vmem:[#allocation2 + $0xf0] sm:$0xff] %v1010
    %1043 = vst [vmem:[#allocation2 + $0xf8] sm:$0xff] %v1011
    // Predicated region
    $region30: #{tpu_custom_call.1} parent=1 // pred_check
      %p1044 = pneg %p74
    $region31: #{tpu_custom_call.1} parent=1 // pred_check_branch
      %1046 = sbr.rel (%p1044) target = $region33
    $region32: #{tpu_custom_call.1} parent=1 // pred_region
      %v1047 = vld [vmem:[#allocation2] sm:$0xff]
      %v1048 = vld [vmem:[#allocation2 + $0x8] sm:$0xff]
      %v1049 = vld [vmem:[#allocation2 + $0x10] sm:$0xff]
      %v1050 = vld [vmem:[#allocation2 + $0x18] sm:$0xff]
      %v1051 = vld [vmem:[#allocation2 + $0x20] sm:$0xff]
      %v1052 = vld [vmem:[#allocation2 + $0x28] sm:$0xff]
      %v1053 = vld [vmem:[#allocation2 + $0x30] sm:$0xff]
      %v1054 = vld [vmem:[#allocation2 + $0x38] sm:$0xff]
      %v1055 = vld [vmem:[#allocation2 + $0x40] sm:$0xff]
      %v1056 = vld [vmem:[#allocation2 + $0x48] sm:$0xff]
      %v1057 = vld [vmem:[#allocation2 + $0x50] sm:$0xff]
      %v1058 = vld [vmem:[#allocation2 + $0x58] sm:$0xff]
      %v1059 = vld [vmem:[#allocation2 + $0x60] sm:$0xff]
      %v1060 = vld [vmem:[#allocation2 + $0x68] sm:$0xff]
      %v1061 = vld [vmem:[#allocation2 + $0x70] sm:$0xff]
      %v1062 = vld [vmem:[#allocation2 + $0x78] sm:$0xff]
      %v1063 = vld [vmem:[#allocation2 + $0x80] sm:$0xff]
      %v1064 = vld [vmem:[#allocation2 + $0x88] sm:$0xff]
      %v1065 = vld [vmem:[#allocation2 + $0x90] sm:$0xff]
      %v1066 = vld [vmem:[#allocation2 + $0x98] sm:$0xff]
      %v1067 = vld [vmem:[#allocation2 + $0xa0] sm:$0xff]
      %v1068 = vld [vmem:[#allocation2 + $0xa8] sm:$0xff]
      %v1069 = vld [vmem:[#allocation2 + $0xb0] sm:$0xff]
      %v1070 = vld [vmem:[#allocation2 + $0xb8] sm:$0xff]
      %v1071 = vld [vmem:[#allocation2 + $0xc0] sm:$0xff]
      %v1072 = vld [vmem:[#allocation2 + $0xc8] sm:$0xff]
      %v1073 = vld [vmem:[#allocation2 + $0xd0] sm:$0xff]
      %v1074 = vld [vmem:[#allocation2 + $0xd8] sm:$0xff]
      %v1075 = vld [vmem:[#allocation2 + $0xe0] sm:$0xff]
      %v1076 = vld [vmem:[#allocation2 + $0xe8] sm:$0xff]
      %v1077 = vld [vmem:[#allocation2 + $0xf0] sm:$0xff]
      %v1078 = vld [vmem:[#allocation2 + $0xf8] sm:$0xff]
      %v1079 = vadd.f32 %v1047, %v1048
      %v1080 = vadd.f32 %v1079, %v1049
      %v1081 = vadd.f32 %v1080, %v1050
      %v1082 = vadd.f32 %v1081, %v1051
      %v1083 = vadd.f32 %v1082, %v1052
      %v1084 = vadd.f32 %v1083, %v1053
      %v1085 = vadd.f32 %v1084, %v1054
      %v1086 = vadd.f32 %v1085, %v1055
      %v1087 = vadd.f32 %v1086, %v1056
      %v1088 = vadd.f32 %v1087, %v1057
      %v1089 = vadd.f32 %v1088, %v1058
      %v1090 = vadd.f32 %v1089, %v1059
      %v1091 = vadd.f32 %v1090, %v1060
      %v1092 = vadd.f32 %v1091, %v1061
      %v1093 = vadd.f32 %v1092, %v1062
      %v1094 = vadd.f32 %v1093, %v1063
      %v1095 = vadd.f32 %v1094, %v1064
      %v1096 = vadd.f32 %v1095, %v1065
      %v1097 = vadd.f32 %v1096, %v1066
      %v1098 = vadd.f32 %v1097, %v1067
      %v1099 = vadd.f32 %v1098, %v1068
      %v1100 = vadd.f32 %v1099, %v1069
      %v1101 = vadd.f32 %v1100, %v1070
      %v1102 = vadd.f32 %v1101, %v1071
      %v1103 = vadd.f32 %v1102, %v1072
      %v1104 = vadd.f32 %v1103, %v1073
      %v1105 = vadd.f32 %v1104, %v1074
      %v1106 = vadd.f32 %v1105, %v1075
      %v1107 = vadd.f32 %v1106, %v1076
      %v1108 = vadd.f32 %v1107, %v1077
      %v1109 = vadd.f32 %v1108, %v1078
      %v1110 = vrot.slane %v1109, 4
      %v1111 = vadd.f32 %v1109, %v1110
      %v1112 = vrot.slane %v1111, 2
      %v1113 = vadd.f32 %v1111, %v1112
      %v1114 = vrot.slane %v1113, 1
      %v1115 = vadd.f32 %v1113, %v1114
      %1116 = vst [vmem:[#allocation9] sm:$0x1] %v1115
    $region33: #{tpu_custom_call.1} parent=1 // pred_fallthru
      _
    // Predicated region
    $region34: #{tpu_custom_call.1} parent=1 // pred_check
      _
    $region35: #{tpu_custom_call.1} parent=1 // pred_check_branch
      %1118 = sbr.rel (0) target = $region37
    $region36: #{tpu_custom_call.1} parent=1 // pred_region
      %1120 = vsyncadd [#allocation5], 0
      %s1122 = sshll.u32 [#allocation9], 4
      %s1123 = int_to_ptr.vmem [resolvable:$true] %s1122
      %s1124 = sshll.u32 %s3, 4
      %s1125 = int_to_ptr.hbm [resolvable:$true] %s1124
      %1127 = dma.vmem_to_hbm [thread:$0]  %s1123, 16, %s1125, [#allocation5]
    $region37: #{tpu_custom_call.1} parent=1 // pred_fallthru
      _
    // Predicated region
    $region38: #{tpu_custom_call.1} parent=1 // pred_check
      _
    $region39: #{tpu_custom_call.1} parent=1 // pred_check_branch
      %1129 = sbr.rel (0) target = $region41
    $region40: #{tpu_custom_call.1} parent=1 // pred_region
      %1131 = dma.done [#allocation5], 16
    $region41: #{tpu_custom_call.1} parent=1 // pred_fallthru
      _
    %1132 = vsyncpa [#allocation4], 1
    %1133 = vsyncpa [#allocation7], 1
    %1134 = vsyncpa [#allocation5], 1

</llo_original>
